<compile_context>
chip_gen: v6e
topology: v6e:2x2x1
jax: 0.10.0
libtpu: 0.0.40
codegen_flags: <defaults>
</compile_context>

<pallas_src>
import functools

import jax
import jax.numpy as jnp
from jax.experimental import pallas as pl
from jax.experimental.pallas import tpu as pltpu


def _pair_max_kernel(a_ref, b_ref, o_ref):
    # a_ref, b_ref, o_ref: (1, oc, tile_s) blocks.  Whole-block VPU max.
    o_ref[...] = jnp.maximum(a_ref[...], b_ref[...])


def _sliced_max_kernel(x_ref, o_ref):
    # General fallback: x_ref holds all C input channels for this tile,
    # (1, C, tile_s); the two groups are static sublane slices.
    oc = o_ref.shape[1]
    o_ref[0, :, :] = jnp.maximum(x_ref[0, 0:oc, :], x_ref[0, oc:2 * oc, :])


def _pick_spatial_tile(s, row_bytes, vmem_budget=8 * 2**20):
    # Largest lane-dense tile (multiple of 128) dividing S whose per-step
    # working set stays inside the budget; fall back to full extent
    # (block dim == array dim is always legal, lanes get masked).
    for t in (8192, 4096, 2048, 1024, 512, 256, 128):
        if s % t == 0 and t * row_bytes <= vmem_budget:
            return t
    return s


@functools.partial(jax.jit, static_argnames=("out_channels",))
def channel_pool_forward(x, out_channels):
    """x: (N, C, H, W) with C >= 2*out_channels. Returns (N, out_channels, H, W)."""
    N, C, H, W = x.shape
    if C < 2 * out_channels:
        raise ValueError("ChannelPool needs at least 2*out_channels input channels")
    S = H * W
    itemsize = jnp.dtype(x.dtype).itemsize
    oc = out_channels

    compiler = lambda vmem: pltpu.CompilerParams(
        dimension_semantics=("parallel", "parallel"),
        vmem_limit_bytes=vmem,
    )

    if C == 2 * oc:
        # ---- Fast path: two sublane-aligned views of the same HBM buffer ----
        x_v = x.reshape(N * 2, oc, S)                 # metadata-only reshape
        rows_per_elem = 3 * oc                        # group A + group B + output
        tile_s = _pick_spatial_tile(S, rows_per_elem * itemsize)
        grid = (N, S // tile_s)
        block_bytes = rows_per_elem * tile_s * itemsize
        vmem_limit = int(min(48 * 2**20, max(4 * 2**20, 4 * block_bytes)))

        out3 = pl.pallas_call(
            _pair_max_kernel,
            out_shape=jax.ShapeDtypeStruct((N, oc, S), x.dtype),
            grid=grid,
            in_specs=[
                pl.BlockSpec((1, oc, tile_s), lambda n, s: (2 * n, 0, s)),
                pl.BlockSpec((1, oc, tile_s), lambda n, s: (2 * n + 1, 0, s)),
            ],
            out_specs=pl.BlockSpec((1, oc, tile_s), lambda n, s: (n, 0, s)),
            compiler_params=compiler(vmem_limit),
        )(x_v, x_v)
    else:
        # ---- General fallback (C > 2*oc): read the full channel block once ----
        x3 = x.reshape(N, C, S)                       # metadata-only reshape
        rows_per_elem = C + oc
        tile_s = _pick_spatial_tile(S, rows_per_elem * itemsize)
        grid = (N, S // tile_s)
        block_bytes = rows_per_elem * tile_s * itemsize
        vmem_limit = int(min(48 * 2**20, max(4 * 2**20, 4 * block_bytes)))

        out3 = pl.pallas_call(
            _sliced_max_kernel,
            out_shape=jax.ShapeDtypeStruct((N, oc, S), x.dtype),
            grid=grid,
            in_specs=[pl.BlockSpec((1, C, tile_s), lambda n, s: (n, 0, s))],
            out_specs=pl.BlockSpec((1, oc, tile_s), lambda n, s: (n, 0, s)),
            compiler_params=compiler(vmem_limit),
        )(x3)

    return out3.reshape(N, oc, H, W)


if __name__ == "__main__":
    out_channels = 4
    N, C, H, W = 2, 2 * out_channels, 16, 16

    key = jax.random.PRNGKey(0)
    x = jax.random.normal(key, (N, C, H, W), jnp.float32)

    out = channel_pool_forward(x, out_channels)
    jax.block_until_ready(out)

    assert out.shape == (N, out_channels, H, W)
    ref = jnp.maximum(x[:, :out_channels], x[:, out_channels:2 * out_channels])
    assert jnp.allclose(out, ref), "Pallas ChannelPool mismatch vs reference"
    print("KERNEL_OK")
</pallas_src>

<mosaic_0001>
module attributes {stable_mosaic.version = 11 : i64} {
  func.func @_pair_max_kernel(%arg0: i32, %arg1: i32, %arg2: memref<1x4x256xf32, #tpu.memory_space<vmem>>, %arg3: memref<1x4x256xf32, #tpu.memory_space<vmem>>, %arg4: memref<1x4x256xf32, #tpu.memory_space<vmem>>) attributes {dimension_semantics = [#tpu.dimension_semantics<parallel>, #tpu.dimension_semantics<parallel>], iteration_bounds = array<i64: 2, 1>, scalar_prefetch = 0 : i64, scratch_operands = 0 : i64, tpu.core_type = #tpu.core_type<tc>, window_params = [{transform_indices = @transform_0, window_bounds = array<i64: 1, 4, 256>}, {transform_indices = @transform_1, window_bounds = array<i64: 1, 4, 256>}, {transform_indices = @transform_2, window_bounds = array<i64: 1, 4, 256>}]} {
    %c0 = arith.constant 0 : index
    %c0_0 = arith.constant 0 : index
    %c0_1 = arith.constant 0 : index
    %0 = vector.load %arg2[%c0, %c0_0, %c0_1] : memref<1x4x256xf32, #tpu.memory_space<vmem>>, vector<1x4x256xf32>
    %c0_2 = arith.constant 0 : index
    %c0_3 = arith.constant 0 : index
    %c0_4 = arith.constant 0 : index
    %1 = vector.load %arg3[%c0_2, %c0_3, %c0_4] : memref<1x4x256xf32, #tpu.memory_space<vmem>>, vector<1x4x256xf32>
    %2 = arith.maximumf %0, %1 : vector<1x4x256xf32>
    %c0_5 = arith.constant 0 : index
    %c0_6 = arith.constant 0 : index
    %c0_7 = arith.constant 0 : index
    %3 = vector.load %arg4[%c0_5, %c0_6, %c0_7] : memref<1x4x256xf32, #tpu.memory_space<vmem>>, vector<1x4x256xf32>
    tpu.vector_store %arg4[%c0_5, %c0_6, %c0_7], %2 {strides = array<i32>} : memref<1x4x256xf32, #tpu.memory_space<vmem>>, vector<1x4x256xf32>,
    return
  }
  func.func @transform_0(%arg0: i32, %arg1: i32) -> (i32, i32, i32) {
    %c2_i32 = arith.constant 2 : i32
    %0 = arith.muli %c2_i32, %arg0 : i32
    %c0_i32 = arith.constant 0 : i32
    %c0_i32_0 = arith.constant 0 : i32
    return %0, %c0_i32, %arg1 : i32, i32, i32
  }
  func.func @transform_1(%arg0: i32, %arg1: i32) -> (i32, i32, i32) {
    %c2_i32 = arith.constant 2 : i32
    %0 = arith.muli %c2_i32, %arg0 : i32
    %c1_i32 = arith.constant 1 : i32
    %1 = arith.addi %0, %c1_i32 : i32
    %c0_i32 = arith.constant 0 : i32
    %c0_i32_0 = arith.constant 0 : i32
    return %1, %c0_i32, %arg1 : i32, i32, i32
  }
  func.func @transform_2(%arg0: i32, %arg1: i32) -> (i32, i32, i32) {
    %c0_i32 = arith.constant 0 : i32
    %c0_i32_0 = arith.constant 0 : i32
    return %arg0, %c0_i32, %arg1 : i32, i32, i32
  }
}

</mosaic_0001>

<llo_original>
// kernel: channel_pool_forward.1
$region0: #{channel_pool_forward.1}
  #allocation0 [shape = 'u32[]', space=smem, size = 0x4, offset = 0x4, fixed_abs, tag = 'smem constant byte address 0x4 - core index']
  #allocation1 [shape = 'u32[144,128]{1,0:T(1,128)}', space=vmem, size = 0x12000, scoped, tag = 'internal scratch']
  %s0 = inlined_call_operand.vmem [shape: f32[4,4,256], index: 0, kind: input, shape index: {}, may-alias: {0,1}]
  %s1 = inlined_call_operand.vmem [shape: f32[4,4,256], index: 1, kind: input, shape index: {}, may-alias: {0,1}]
  %s2 = inlined_call_operand.vmem [shape: f32[2,4,256], index: 2, kind: output, shape index: {}]
  %s3 = sld [smem:[#allocation0]]
  $region41: #{channel_pool_forward.1} parent=0
    _
  %s5 = ssub.s32 1, %s3
  %s6 = scalar_select 0, %s5, %s3
  loop: start=0, step=1, limit=4
  $region2: #{channel_pool_forward.1} parent=0 // loop_pre_header
    _
  $region3: #{channel_pool_forward.1} parent=0 // loop_header
    %s8 = sphi 0, %s12
    %p9 = scmp.ge.s32.totalorder %s8, 4
    %s15 = sphi 0, %s27
    %s16 = sphi 0, %s23
    %s17 = sphi 0, %s15
    %s18 = sphi 0, %s16
    %s19 = sphi 0, %s17
    %s20 = sphi 0, %s18
    %s34 = sphi 0, %s36
    %s37 = sphi 0, %s34
    %s38 = sphi 0, %s37
    %s54 = sphi 0, %s38
    %s66 = sphi 0, %s68
    %s69 = sphi 0, %s66
    %s70 = sphi 0, %s69
    %s86 = sphi 0, %s70
    %s94 = sphi 0, %s96
    %s97 = sphi 0, %s94
    %s98 = sphi 0, %s97
    %s114 = sphi 0, %s98
  $region4: #{channel_pool_forward.1} parent=0 // loop_header_branch
    %11 = sbr.rel (%p9) target = $region8
  $region5: #{channel_pool_forward.1} parent=0 // loop_body
    %s13 = ssub.s32 %s8, 1
    %s14 = ssub.s32 %s8, 2
    %s21 = sadd.s32 1, %s16
    %p22 = scmp.ge.s32.totalorder %s21, 1
    %s23 = scalar_select %p22, 0, %s21
    %s24 = sadd.s32 1, %s15
    %s25 = scalar_select %p22, %s24, %s15
    %p26 = scmp.ge.s32.totalorder %s25, 2
    %s27 = scalar_select %p26, 0, %s25
    %s28 = smul.u32 %s15, 2
    %s29 = smul.u32 %s27, 2
    %s30 = ssub.s32 %s28, %s29
    %s31 = ssub.s32 %s16, %s23
    %s32 = sor.u32 %s30, %s31
    %p33 = scmp.eq.s32.totalorder %s32, 0
    %s35 = sadd.s32 %s34, 1
    %s36 = scalar_select %p33, %s34, %s35
    %p39 = pneg %p33
    %p40 = scmp.eq.s32.totalorder %s8, 1
    %p41 = por %p39, %p40
    %p42 = scmp.ne.s32.totalorder %s34, %s37
    %p43 = scmp.eq.s32.totalorder %s8, 0
    %p44 = por %p42, %p43
    %p45 = scmp.ne.s32.totalorder %s34, %s37
    %p46 = scmp.eq.s32.totalorder %s13, 1
    %p47 = por %p45, %p46
    %p48 = scmp.ne.s32.totalorder %s37, %s38
    %p49 = scmp.eq.s32.totalorder %s13, 0
    %p50 = por %p48, %p49
    %p51 = scmp.ne.s32.totalorder %s37, %s38
    %p52 = scmp.eq.s32.totalorder %s14, 1
    %p53 = por %p51, %p52
    %p55 = scmp.ne.s32.totalorder %s38, %s54
    %p56 = scmp.eq.s32.totalorder %s14, 0
    %p57 = por %p55, %p56
    %s58 = smul.u32 %s15, 2
    %s59 = sadd.s32 %s58, 1
    %s60 = smul.u32 %s27, 2
    %s61 = sadd.s32 %s60, 1
    %s62 = ssub.s32 %s59, %s61
    %s63 = ssub.s32 %s16, %s23
    %s64 = sor.u32 %s62, %s63
    %p65 = scmp.eq.s32.totalorder %s64, 0
    %s67 = sadd.s32 %s66, 1
    %s68 = scalar_select %p65, %s66, %s67
    %p71 = pneg %p65
    %p72 = scmp.eq.s32.totalorder %s8, 1
    %p73 = por %p71, %p72
    %p74 = scmp.ne.s32.totalorder %s66, %s69
    %p75 = scmp.eq.s32.totalorder %s8, 0
    %p76 = por %p74, %p75
    %p77 = scmp.ne.s32.totalorder %s66, %s69
    %p78 = scmp.eq.s32.totalorder %s13, 1
    %p79 = por %p77, %p78
    %p80 = scmp.ne.s32.totalorder %s69, %s70
    %p81 = scmp.eq.s32.totalorder %s13, 0
    %p82 = por %p80, %p81
    %p83 = scmp.ne.s32.totalorder %s69, %s70
    %p84 = scmp.eq.s32.totalorder %s14, 1
    %p85 = por %p83, %p84
    %p87 = scmp.ne.s32.totalorder %s70, %s86
    %p88 = scmp.eq.s32.totalorder %s14, 0
    %p89 = por %p87, %p88
    %s90 = ssub.s32 %s15, %s27
    %s91 = ssub.s32 %s16, %s23
    %s92 = sor.u32 %s90, %s91
    %p93 = scmp.eq.s32.totalorder %s92, 0
    %s95 = sadd.s32 %s94, 1
    %s96 = scalar_select %p93, %s94, %s95
    %p99 = pneg %p93
    %p100 = scmp.eq.s32.totalorder %s8, 1
    %p101 = por %p99, %p100
    %p102 = scmp.ne.s32.totalorder %s94, %s97
    %p103 = scmp.eq.s32.totalorder %s8, 0
    %p104 = por %p102, %p103
    %p105 = scmp.ne.s32.totalorder %s94, %s97
    %p106 = scmp.eq.s32.totalorder %s13, 1
    %p107 = por %p105, %p106
    %p108 = scmp.ne.s32.totalorder %s97, %s98
    %p109 = scmp.eq.s32.totalorder %s13, 0
    %p110 = por %p108, %p109
    %p111 = scmp.ne.s32.totalorder %s97, %s98
    %p112 = scmp.eq.s32.totalorder %s14, 1
    %p113 = por %p111, %p112
    %p115 = scmp.ne.s32.totalorder %s98, %s114
    %p116 = scmp.eq.s32.totalorder %s14, 0
    %p117 = por %p115, %p116
    %p118 = scmp.le.s32.totalorder 1, %s8
    %p119 = scmp.lt.s32.totalorder %s8, 3
    %p120 = pnand %p118, %p119
    %p121 = pneg %p120
    // Predicated region
    $region9: #{channel_pool_forward.1} parent=5 // pred_check
      _
    $region10: #{channel_pool_forward.1} parent=5 // pred_check_branch
      %123 = sbr.rel (%p120) target = $region12
    $region11: #{channel_pool_forward.1} parent=5 // pred_region
      %s124 = ssub.s32 %s8, 1
    $region12: #{channel_pool_forward.1} parent=5 // pred_fallthru
      _
    %p125 = scmp.lt.s32.totalorder %s8, 2
    // Predicated region
    $region13: #{channel_pool_forward.1} parent=5 // pred_check
      %p126 = pneg %p125
    $region14: #{channel_pool_forward.1} parent=5 // pred_check_branch
      %128 = sbr.rel (%p126) target = $region16
    $region15: #{channel_pool_forward.1} parent=5 // pred_region
      // Predicated region
      $region17: #{channel_pool_forward.1} parent=15 // pred_check
        %p129 = pneg %p44
      $region18: #{channel_pool_forward.1} parent=15 // pred_check_branch
        %131 = sbr.rel (%p129) target = $region20
      $region19: #{channel_pool_forward.1} parent=15 // pred_region
        %s132 = smul.u32 %s15, 2
        %s133 = smul.u32 2, %s16
        %p134 = scmp.lt.s32.totalorder %s132, 3
        %s135 = scalar_select %p134, %s132, 3
        %p136 = scmp.lt.s32.totalorder %s133, 1
        %s137 = scalar_select %p136, %s133, 1
        %s138 = smul.addr %s135, 2
        %s139 = sadd.s32 %s137, %s138
        %s140 = smul.addr %s139, 4
        %s141 = scalar_lea.vmem %s0, %s140
        %s142 = smul.u32 %s15, 2
        %s143 = smul.u32 2, %s16
      $region20: #{channel_pool_forward.1} parent=15 // pred_fallthru
        _
      // Predicated region
      $region21: #{channel_pool_forward.1} parent=15 // pred_check
        %p144 = pneg %p76
      $region22: #{channel_pool_forward.1} parent=15 // pred_check_branch
        %146 = sbr.rel (%p144) target = $region24
      $region23: #{channel_pool_forward.1} parent=15 // pred_region
        %s147 = smul.u32 %s15, 2
        %s148 = sadd.s32 %s147, 1
        %s149 = smul.u32 2, %s16
        %p150 = scmp.lt.s32.totalorder %s148, 3
        %s151 = scalar_select %p150, %s148, 3
        %p152 = scmp.lt.s32.totalorder %s149, 1
        %s153 = scalar_select %p152, %s149, 1
        %s154 = smul.addr %s151, 2
        %s155 = sadd.s32 %s153, %s154
        %s156 = smul.addr %s155, 4
        %s157 = scalar_lea.vmem %s1, %s156
        %s158 = smul.u32 %s15, 2
        %s159 = sadd.s32 %s158, 1
        %s160 = smul.u32 2, %s16
      $region24: #{channel_pool_forward.1} parent=15 // pred_fallthru
        _
    $region16: #{channel_pool_forward.1} parent=5 // pred_fallthru
      _
    %p161 = scmp.le.s32.totalorder 1, %s8
    %p162 = scmp.lt.s32.totalorder %s8, 3
    %p163 = pnand %p161, %p162
    %p164 = pneg %p163
    // Predicated region
    $region25: #{channel_pool_forward.1} parent=5 // pred_check
      _
    $region26: #{channel_pool_forward.1} parent=5 // pred_check_branch
      %166 = sbr.rel (%p163) target = $region28
    $region27: #{channel_pool_forward.1} parent=5 // pred_region
      %s167 = ssub.s32 %s8, 1
      %s168 = smul.u32 %s17, 2
      %s169 = smul.u32 2, %s18
      %p170 = scmp.lt.s32.totalorder %s168, 3
      %s171 = scalar_select %p170, %s168, 3
      %p172 = scmp.lt.s32.totalorder %s169, 1
      %s173 = scalar_select %p172, %s169, 1
      %s174 = smul.addr %s171, 2
      %s175 = sadd.s32 %s173, %s174
      %s176 = smul.addr %s175, 4
      %s177 = scalar_lea.vmem %s0, %s176
      %p178 = pneg %p50
      %p179 = pneg %p47
      %s180 = smul.u32 %s17, 2
      %s181 = sadd.s32 %s180, 1
      %s182 = smul.u32 2, %s18
      %p183 = scmp.lt.s32.totalorder %s181, 3
      %s184 = scalar_select %p183, %s181, 3
      %p185 = scmp.lt.s32.totalorder %s182, 1
      %s186 = scalar_select %p185, %s182, 1
      %s187 = smul.addr %s184, 2
      %s188 = sadd.s32 %s186, %s187
      %s189 = smul.addr %s188, 4
      %s190 = scalar_lea.vmem %s1, %s189
      %p191 = pneg %p82
      %p192 = pneg %p79
      %p193 = pneg %p110
      %p194 = pneg %p107
      %s195 = smul.u32 2, %s18
      %p196 = scmp.lt.s32.totalorder %s17, 1
      %s197 = scalar_select %p196, %s17, 1
      %p198 = scmp.lt.s32.totalorder %s195, 1
      %s199 = scalar_select %p198, %s195, 1
      %s200 = smul.addr %s197, 2
      %s201 = sadd.s32 %s199, %s200
      %s202 = smul.addr %s201, 4
      %s203 = scalar_lea.vmem %s2, %s202
      %s204 = smul.u32 %s17, 2
      %s205 = smul.u32 2, %s18
      %p206 = scmp.lt.s32.totalorder %s204, 3
      %s207 = scalar_select %p206, %s204, 3
      %p208 = scmp.lt.s32.totalorder %s205, 1
      %s209 = scalar_select %p208, %s205, 1
      %s210 = smul.addr %s207, 2
      %s211 = sadd.s32 %s209, %s210
      %s212 = smul.addr %s211, 4
      %s213 = scalar_lea.vmem %s0, %s212
      %s214 = smul.u32 %s17, 2
      %s215 = smul.u32 2, %s18
      %s216 = smul.u32 %s17, 2
      %s217 = sadd.s32 %s216, 1
      %s218 = smul.u32 2, %s18
      %p219 = scmp.lt.s32.totalorder %s217, 3
      %s220 = scalar_select %p219, %s217, 3
      %p221 = scmp.lt.s32.totalorder %s218, 1
      %s222 = scalar_select %p221, %s218, 1
      %s223 = smul.addr %s220, 2
      %s224 = sadd.s32 %s222, %s223
      %s225 = smul.addr %s224, 4
      %s226 = scalar_lea.vmem %s1, %s225
      %s227 = smul.u32 %s17, 2
      %s228 = sadd.s32 %s227, 1
      %s229 = smul.u32 2, %s18
      %s230 = smul.u32 2, %s18
      %p231 = scmp.lt.s32.totalorder %s17, 1
      %s232 = scalar_select %p231, %s17, 1
      %p233 = scmp.lt.s32.totalorder %s230, 1
      %s234 = scalar_select %p233, %s230, 1
      %s235 = smul.addr %s232, 2
      %s236 = sadd.s32 %s234, %s235
      %s237 = smul.addr %s236, 4
      %s238 = scalar_lea.vmem %s2, %s237
      %s239 = smul.u32 2, %s18
      %v240 = vld [vmem:[%s213] sm:$0xff]
      %v241 = vld [vmem:[%s226] sm:$0xff]
      %v242 = vmax.f32 %v240, %v241
      %243 = vst [vmem:[%s238] sm:$0xff] %v242
      %s244 = smul.u32 2, %s18
      %p245 = scmp.lt.s32.totalorder %s17, 1
      %s246 = scalar_select %p245, %s17, 1
      %p247 = scmp.lt.s32.totalorder %s244, 1
      %s248 = scalar_select %p247, %s244, 1
      %s249 = smul.addr %s246, 2
      %s250 = sadd.s32 %s248, %s249
      %s251 = smul.addr %s250, 4
      %s252 = scalar_lea.vmem %s2, %s251
      // Predicated region
      $region29: #{channel_pool_forward.1} parent=27 // pred_check
        %p253 = pneg %p107
      $region30: #{channel_pool_forward.1} parent=27 // pred_check_branch
        %255 = sbr.rel (%p253) target = $region32
      $region31: #{channel_pool_forward.1} parent=27 // pred_region
        %s256 = smul.u32 2, %s18
      $region32: #{channel_pool_forward.1} parent=27 // pred_fallthru
        _
    $region28: #{channel_pool_forward.1} parent=5 // pred_fallthru
      _
    %p257 = scmp.le.s32.totalorder 2, %s8
    // Predicated region
    $region33: #{channel_pool_forward.1} parent=5 // pred_check
      %p258 = pneg %p257
    $region34: #{channel_pool_forward.1} parent=5 // pred_check_branch
      %260 = sbr.rel (%p258) target = $region36
    $region35: #{channel_pool_forward.1} parent=5 // pred_region
      %s261 = ssub.s32 %s8, 2
      // Predicated region
      $region37: #{channel_pool_forward.1} parent=35 // pred_check
        %p262 = pneg %p113
      $region38: #{channel_pool_forward.1} parent=35 // pred_check_branch
        %264 = sbr.rel (%p262) target = $region40
      $region39: #{channel_pool_forward.1} parent=35 // pred_region
        %s265 = smul.u32 2, %s20
        %p266 = scmp.lt.s32.totalorder %s19, 1
        %s267 = scalar_select %p266, %s19, 1
        %p268 = scmp.lt.s32.totalorder %s265, 1
        %s269 = scalar_select %p268, %s265, 1
        %s270 = smul.addr %s267, 2
        %s271 = sadd.s32 %s269, %s270
        %s272 = smul.addr %s271, 4
        %s273 = scalar_lea.vmem %s2, %s272
      $region40: #{channel_pool_forward.1} parent=35 // pred_fallthru
        _
    $region36: #{channel_pool_forward.1} parent=5 // pred_fallthru
      _
  $region6: #{channel_pool_forward.1} parent=0 // loop_footer
    %s12 = sadd.s32 1, %s8
  $region7: #{channel_pool_forward.1} parent=0 // loop_footer_branch
    %7 = sbr.rel target = $region3
  $region8: #{channel_pool_forward.1} parent=0 // loop_exit
    _

</llo_original>
